<compile_context>
chip_gen: v6e
topology: v6e:2x2x1
jax: 0.10.0
libtpu: 0.0.40
codegen_flags: <defaults>
</compile_context>

<pallas_src>
import functools

import jax
import jax.numpy as jnp
from jax.experimental import pallas as pl
from jax.experimental.pallas import tpu as pltpu

IN_FEATURES = 784          # 1 * 28 * 28, from nn.Flatten()
H1, H2, H3 = 9, 7, 5
OUT_FEATURES = 10

# Batch tile: multiple of 8 sublanes; big enough to amortize the ~0.35 us
# per-grid-step overhead against the ~4 us tile DMA, small enough to fit VMEM.
TILE_B_MAX = 1024


def _round_up(x, m):
    return (x + m - 1) // m * m


def _fnn_relu_kernel(x_ref, w1_ref, b1_ref, w2_ref, b2_ref, w3_ref, b3_ref,
                     w4_ref, b4_ref, o_ref):
    # x: (TILE_B, 784) f32.  All four linears run on the MXU with f32
    # accumulation; ReLUs are VPU ops, all hidden under the x-stream DMA.
    x = x_ref[...]
    h = jnp.dot(x, w1_ref[...], preferred_element_type=jnp.float32) + b1_ref[...]
    h = jnp.maximum(h, 0.0)
    h = jnp.dot(h, w2_ref[...], preferred_element_type=jnp.float32) + b2_ref[...]
    h = jnp.maximum(h, 0.0)
    h = jnp.dot(h, w3_ref[...], preferred_element_type=jnp.float32) + b3_ref[...]
    h = jnp.maximum(h, 0.0)
    out = jnp.dot(h, w4_ref[...], preferred_element_type=jnp.float32) + b4_ref[...]
    o_ref[...] = out.astype(o_ref.dtype)


@functools.partial(jax.jit, static_argnames=("tile_b_max",))
def fnn_relu_forward(x_nchw, params, *, tile_b_max=TILE_B_MAX):
    """x_nchw: (B, 1, 28, 28) float32 (NCHW like PyTorch).  Returns (B, 10) f32."""
    B = x_nchw.shape[0]
    w1, b1, w2, b2, w3, b3, w4, b4 = params

    # nn.Flatten(): row-major flatten of (C, H, W) -> 784.  Pure metadata
    # reshape (contiguous), no extra HBM pass.
    x_flat = x_nchw.reshape(B, IN_FEATURES)

    # Pick the batch tile (multiple of 8 sublanes) and pad B up to a whole
    # number of tiles so every grid step sees a full block.
    tile_b = min(tile_b_max, _round_up(B, 8))
    b_pad = _round_up(B, tile_b)
    if b_pad != B:
        x_flat = jnp.pad(x_flat, ((0, b_pad - B), (0, 0)))
    grid = (b_pad // tile_b,)

    const2d = lambda i: (0, 0)   # weights / biases: resident, fetched once

    out = pl.pallas_call(
        _fnn_relu_kernel,
        out_shape=jax.ShapeDtypeStruct((b_pad, OUT_FEATURES), jnp.float32),
        grid=grid,
        in_specs=[
            # x streams tile-by-tile over the batch (auto double-buffered).
            pl.BlockSpec((tile_b, IN_FEATURES), lambda i: (i, 0)),
            pl.BlockSpec(w1.shape, const2d),
            pl.BlockSpec(b1.shape, const2d),
            pl.BlockSpec(w2.shape, const2d),
            pl.BlockSpec(b2.shape, const2d),
            pl.BlockSpec(w3.shape, const2d),
            pl.BlockSpec(b3.shape, const2d),
            pl.BlockSpec(w4.shape, const2d),
            pl.BlockSpec(b4.shape, const2d),
        ],
        out_specs=pl.BlockSpec((tile_b, OUT_FEATURES), lambda i: (i, 0)),
        compiler_params=pltpu.CompilerParams(
            # Batch tiles are independent -> shard the grid across both
            # TensorCores on v7x; harmless on single-TC v5e/v6e.
            dimension_semantics=("parallel",),
            # ~10 MiB live (x double-buffer 6.3 MiB + out/weights/temps);
            # 32 MiB is safe on v5e (128 MiB phys), v6e (128) and v7x (64).
            vmem_limit_bytes=32 * 1024 * 1024,
        ),
    )(x_flat, w1, b1, w2, b2, w3, b3, w4, b4)
    return out[:B]


def init_params(key):
    """PyTorch nn.Linear default init: U(-1/sqrt(fan_in), +1/sqrt(fan_in))."""
    ks = jax.random.split(key, 8)

    def linear(kw, kb, fan_in, fan_out):
        bound = 1.0 / jnp.sqrt(fan_in)
        w = jax.random.uniform(kw, (fan_in, fan_out), jnp.float32, -bound, bound)
        b = jax.random.uniform(kb, (1, fan_out), jnp.float32, -bound, bound)
        return w, b

    w1, b1 = linear(ks[0], ks[1], IN_FEATURES, H1)
    w2, b2 = linear(ks[2], ks[3], H1, H2)
    w3, b3 = linear(ks[4], ks[5], H2, H3)
    w4, b4 = linear(ks[6], ks[7], H3, OUT_FEATURES)
    return (w1, b1, w2, b2, w3, b3, w4, b4)


def _reference(x, params):
    """Pure-JAX (XLA) forward in f32, identical semantics to the PyTorch module."""
    w1, b1, w2, b2, w3, b3, w4, b4 = params
    B = x.shape[0]
    h = x.reshape(B, IN_FEATURES)
    h = jnp.maximum(h @ w1 + b1, 0.0)
    h = jnp.maximum(h @ w2 + b2, 0.0)
    h = jnp.maximum(h @ w3 + b3, 0.0)
    return h @ w4 + b4


if __name__ == "__main__":
    key = jax.random.PRNGKey(0)
    k_x, k_p = jax.random.split(key)

    # MNIST-like input implied by Linear(784, ...): (B, 1, 28, 28)
    B = 2
    x = jax.random.normal(k_x, (B, 1, 28, 28), dtype=jnp.float32)
    params = init_params(k_p)

    out = fnn_relu_forward(x, params)
    jax.block_until_ready(out)
    assert out.shape == (B, 10)
    ref = _reference(x, params)
    assert jnp.allclose(out, ref, atol=2e-3, rtol=2e-3), float(
        jnp.max(jnp.abs(out - ref)))

    # Exercise the multi-step grid + batch-padding path with a small tile.
    B2 = 300
    x2 = jax.random.normal(jax.random.PRNGKey(1), (B2, 1, 28, 28),
                           dtype=jnp.float32)
    out2 = fnn_relu_forward(x2, params, tile_b_max=128)  # grid of 3 steps
    jax.block_until_ready(out2)
    assert out2.shape == (B2, 10)
    ref2 = _reference(x2, params)
    assert jnp.allclose(out2, ref2, atol=2e-3, rtol=2e-3), float(
        jnp.max(jnp.abs(out2 - ref2)))

    print("KERNEL_OK")
</pallas_src>

<mosaic_0001>
module attributes {stable_mosaic.version = 11 : i64} {
  func.func @_fnn_relu_kernel(%arg0: i32, %arg1: memref<8x784xf32, #tpu.memory_space<vmem>>, %arg2: memref<784x9xf32, #tpu.memory_space<vmem>>, %arg3: memref<1x9xf32, #tpu.memory_space<vmem>>, %arg4: memref<9x7xf32, #tpu.memory_space<vmem>>, %arg5: memref<1x7xf32, #tpu.memory_space<vmem>>, %arg6: memref<7x5xf32, #tpu.memory_space<vmem>>, %arg7: memref<1x5xf32, #tpu.memory_space<vmem>>, %arg8: memref<5x10xf32, #tpu.memory_space<vmem>>, %arg9: memref<1x10xf32, #tpu.memory_space<vmem>>, %arg10: memref<8x10xf32, #tpu.memory_space<vmem>>) attributes {dimension_semantics = [#tpu.dimension_semantics<parallel>], iteration_bounds = array<i64: 1>, scalar_prefetch = 0 : i64, scratch_operands = 0 : i64, tpu.core_type = #tpu.core_type<tc>, window_params = [{transform_indices = @transform_0, window_bounds = array<i64: 8, 784>}, {pipeline_mode = #tpu.pipeline_mode<synchronous>, transform_indices = @transform_1, window_bounds = array<i64: 784, 9>}, {pipeline_mode = #tpu.pipeline_mode<synchronous>, transform_indices = @transform_2, window_bounds = array<i64: 1, 9>}, {pipeline_mode = #tpu.pipeline_mode<synchronous>, transform_indices = @transform_3, window_bounds = array<i64: 9, 7>}, {pipeline_mode = #tpu.pipeline_mode<synchronous>, transform_indices = @transform_4, window_bounds = array<i64: 1, 7>}, {pipeline_mode = #tpu.pipeline_mode<synchronous>, transform_indices = @transform_5, window_bounds = array<i64: 7, 5>}, {pipeline_mode = #tpu.pipeline_mode<synchronous>, transform_indices = @transform_6, window_bounds = array<i64: 1, 5>}, {pipeline_mode = #tpu.pipeline_mode<synchronous>, transform_indices = @transform_7, window_bounds = array<i64: 5, 10>}, {pipeline_mode = #tpu.pipeline_mode<synchronous>, transform_indices = @transform_8, window_bounds = array<i64: 1, 10>}, {transform_indices = @transform_9, window_bounds = array<i64: 8, 10>}]} {
    %c0 = arith.constant 0 : index
    %c0_0 = arith.constant 0 : index
    %0 = vector.load %arg1[%c0, %c0_0] : memref<8x784xf32, #tpu.memory_space<vmem>>, vector<8x784xf32>
    %c0_1 = arith.constant 0 : index
    %c0_2 = arith.constant 0 : index
    %1 = vector.load %arg2[%c0_1, %c0_2] : memref<784x9xf32, #tpu.memory_space<vmem>>, vector<784x9xf32>
    %cst = arith.constant dense<0.000000e+00> : vector<8x9xf32>
    %2 = tpu.matmul %0, %1, %cst {dimension_numbers = #tpu.dot_dimension_numbers<[1], [0], [0], [1], [0, 0, 1, 1], [], []>} : vector<8x784xf32>, vector<784x9xf32>, vector<8x9xf32> -> vector<8x9xf32>
    %c0_3 = arith.constant 0 : index
    %c0_4 = arith.constant 0 : index
    %3 = vector.load %arg3[%c0_3, %c0_4] : memref<1x9xf32, #tpu.memory_space<vmem>>, vector<1x9xf32>
    %4 = vector.broadcast %3 : vector<1x9xf32> to vector<8x9xf32>
    %5 = arith.addf %2, %4 : vector<8x9xf32>
    %cst_5 = arith.constant 0.000000e+00 : f32
    %6 = vector.broadcast %cst_5 : f32 to vector<8x9xf32>
    %7 = arith.maximumf %5, %6 : vector<8x9xf32>
    %c0_6 = arith.constant 0 : index
    %c0_7 = arith.constant 0 : index
    %8 = vector.load %arg4[%c0_6, %c0_7] : memref<9x7xf32, #tpu.memory_space<vmem>>, vector<9x7xf32>
    %cst_8 = arith.constant dense<0.000000e+00> : vector<8x7xf32>
    %9 = tpu.matmul %7, %8, %cst_8 {dimension_numbers = #tpu.dot_dimension_numbers<[1], [0], [0], [1], [0, 0, 1, 1], [], []>} : vector<8x9xf32>, vector<9x7xf32>, vector<8x7xf32> -> vector<8x7xf32>
    %c0_9 = arith.constant 0 : index
    %c0_10 = arith.constant 0 : index
    %10 = vector.load %arg5[%c0_9, %c0_10] : memref<1x7xf32, #tpu.memory_space<vmem>>, vector<1x7xf32>
    %11 = vector.broadcast %10 : vector<1x7xf32> to vector<8x7xf32>
    %12 = arith.addf %9, %11 : vector<8x7xf32>
    %cst_11 = arith.constant 0.000000e+00 : f32
    %13 = vector.broadcast %cst_11 : f32 to vector<8x7xf32>
    %14 = arith.maximumf %12, %13 : vector<8x7xf32>
    %c0_12 = arith.constant 0 : index
    %c0_13 = arith.constant 0 : index
    %15 = vector.load %arg6[%c0_12, %c0_13] : memref<7x5xf32, #tpu.memory_space<vmem>>, vector<7x5xf32>
    %cst_14 = arith.constant dense<0.000000e+00> : vector<8x5xf32>
    %16 = tpu.matmul %14, %15, %cst_14 {dimension_numbers = #tpu.dot_dimension_numbers<[1], [0], [0], [1], [0, 0, 1, 1], [], []>} : vector<8x7xf32>, vector<7x5xf32>, vector<8x5xf32> -> vector<8x5xf32>
    %c0_15 = arith.constant 0 : index
    %c0_16 = arith.constant 0 : index
    %17 = vector.load %arg7[%c0_15, %c0_16] : memref<1x5xf32, #tpu.memory_space<vmem>>, vector<1x5xf32>
    %18 = vector.broadcast %17 : vector<1x5xf32> to vector<8x5xf32>
    %19 = arith.addf %16, %18 : vector<8x5xf32>
    %cst_17 = arith.constant 0.000000e+00 : f32
    %20 = vector.broadcast %cst_17 : f32 to vector<8x5xf32>
    %21 = arith.maximumf %19, %20 : vector<8x5xf32>
    %c0_18 = arith.constant 0 : index
    %c0_19 = arith.constant 0 : index
    %22 = vector.load %arg8[%c0_18, %c0_19] : memref<5x10xf32, #tpu.memory_space<vmem>>, vector<5x10xf32>
    %cst_20 = arith.constant dense<0.000000e+00> : vector<8x10xf32>
    %23 = tpu.matmul %21, %22, %cst_20 {dimension_numbers = #tpu.dot_dimension_numbers<[1], [0], [0], [1], [0, 0, 1, 1], [], []>} : vector<8x5xf32>, vector<5x10xf32>, vector<8x10xf32> -> vector<8x10xf32>
    %c0_21 = arith.constant 0 : index
    %c0_22 = arith.constant 0 : index
    %24 = vector.load %arg9[%c0_21, %c0_22] : memref<1x10xf32, #tpu.memory_space<vmem>>, vector<1x10xf32>
    %25 = vector.broadcast %24 : vector<1x10xf32> to vector<8x10xf32>
    %26 = arith.addf %23, %25 : vector<8x10xf32>
    %c0_23 = arith.constant 0 : index
    %c0_24 = arith.constant 0 : index
    %27 = vector.load %arg10[%c0_23, %c0_24] : memref<8x10xf32, #tpu.memory_space<vmem>>, vector<8x10xf32>
    tpu.vector_store %arg10[%c0_23, %c0_24], %26 {strides = array<i32>} : memref<8x10xf32, #tpu.memory_space<vmem>>, vector<8x10xf32>,
    return
  }
  func.func @transform_0(%arg0: i32) -> (i32, i32) {
    %c0_i32 = arith.constant 0 : i32
    %c0_i32_0 = arith.constant 0 : i32
    return %arg0, %c0_i32 : i32, i32
  }
  func.func @transform_1(%arg0: i32) -> (i32, i32) {
    %c0_i32 = arith.constant 0 : i32
    %c0_i32_0 = arith.constant 0 : i32
    %c0_i32_1 = arith.constant 0 : i32
    return %c0_i32, %c0_i32_0 : i32, i32
  }
  func.func @transform_2(%arg0: i32) -> (i32, i32) {
    %c0_i32 = arith.constant 0 : i32
    %c0_i32_0 = arith.constant 0 : i32
    %c0_i32_1 = arith.constant 0 : i32
    return %c0_i32, %c0_i32_0 : i32, i32
  }
  func.func @transform_3(%arg0: i32) -> (i32, i32) {
    %c0_i32 = arith.constant 0 : i32
    %c0_i32_0 = arith.constant 0 : i32
    %c0_i32_1 = arith.constant 0 : i32
    return %c0_i32, %c0_i32_0 : i32, i32
  }
  func.func @transform_4(%arg0: i32) -> (i32, i32) {
    %c0_i32 = arith.constant 0 : i32
    %c0_i32_0 = arith.constant 0 : i32
    %c0_i32_1 = arith.constant 0 : i32
    return %c0_i32, %c0_i32_0 : i32, i32
  }
  func.func @transform_5(%arg0: i32) -> (i32, i32) {
    %c0_i32 = arith.constant 0 : i32
    %c0_i32_0 = arith.constant 0 : i32
    %c0_i32_1 = arith.constant 0 : i32
    return %c0_i32, %c0_i32_0 : i32, i32
  }
  func.func @transform_6(%arg0: i32) -> (i32, i32) {
    %c0_i32 = arith.constant 0 : i32
    %c0_i32_0 = arith.constant 0 : i32
    %c0_i32_1 = arith.constant 0 : i32
    return %c0_i32, %c0_i32_0 : i32, i32
  }
  func.func @transform_7(%arg0: i32) -> (i32, i32) {
    %c0_i32 = arith.constant 0 : i32
    %c0_i32_0 = arith.constant 0 : i32
    %c0_i32_1 = arith.constant 0 : i32
    return %c0_i32, %c0_i32_0 : i32, i32
  }
  func.func @transform_8(%arg0: i32) -> (i32, i32) {
    %c0_i32 = arith.constant 0 : i32
    %c0_i32_0 = arith.constant 0 : i32
    %c0_i32_1 = arith.constant 0 : i32
    return %c0_i32, %c0_i32_0 : i32, i32
  }
  func.func @transform_9(%arg0: i32) -> (i32, i32) {
    %c0_i32 = arith.constant 0 : i32
    %c0_i32_0 = arith.constant 0 : i32
    return %arg0, %c0_i32 : i32, i32
  }
}

</mosaic_0001>

<llo_original>
// kernel: fnn_relu_forward.1
$region0: #{fnn_relu_forward.1}
  #allocation0 [shape = 'u32[]', space=smem, size = 0x4, offset = 0x4, fixed_abs, tag = 'smem constant byte address 0x4 - core index']
  #allocation1 [shape = 'u32[144,128]{1,0:T(1,128)}', space=vmem, size = 0x12000, scoped, tag = 'internal scratch']
  %s0 = inlined_call_operand.vmem [shape: f32[8,784], index: 0, kind: input, shape index: {}]
  %s1 = inlined_call_operand.vmem [shape: f32[784,9], index: 1, kind: input, shape index: {}]
  %s2 = inlined_call_operand.vmem [shape: f32[1,9], index: 2, kind: input, shape index: {}]
  %s3 = inlined_call_operand.vmem [shape: f32[9,7], index: 3, kind: input, shape index: {}]
  %s4 = inlined_call_operand.vmem [shape: f32[1,7], index: 4, kind: input, shape index: {}]
  %s5 = inlined_call_operand.vmem [shape: f32[7,5], index: 5, kind: input, shape index: {}]
  %s6 = inlined_call_operand.vmem [shape: f32[1,5], index: 6, kind: input, shape index: {}]
  %s7 = inlined_call_operand.vmem [shape: f32[5,10], index: 7, kind: input, shape index: {}]
  %s8 = inlined_call_operand.vmem [shape: f32[1,10], index: 8, kind: input, shape index: {}]
  %s9 = inlined_call_operand.vmem [shape: f32[8,10], index: 9, kind: output, shape index: {}]
  %s10 = sld [smem:[#allocation0]]
  $region46: #{fnn_relu_forward.1} parent=0
    _
  %s12 = ssub.s32 1, %s10
  %s13 = scalar_select 0, %s12, %s10
  // Predicated region
  $region2: #{fnn_relu_forward.1} parent=0 // pred_check
    _
  $region3: #{fnn_relu_forward.1} parent=0 // pred_check_branch
    %15 = sbr.rel (0) target = $region5
  $region4: #{fnn_relu_forward.1} parent=0 // pred_region
    _
  $region5: #{fnn_relu_forward.1} parent=0 // pred_fallthru
    _
  // Predicated region
  $region6: #{fnn_relu_forward.1} parent=0 // pred_check
    _
  $region7: #{fnn_relu_forward.1} parent=0 // pred_check_branch
    %17 = sbr.rel (0) target = $region9
  $region8: #{fnn_relu_forward.1} parent=0 // pred_region
    _
  $region9: #{fnn_relu_forward.1} parent=0 // pred_fallthru
    _
  // Predicated region
  $region10: #{fnn_relu_forward.1} parent=0 // pred_check
    _
  $region11: #{fnn_relu_forward.1} parent=0 // pred_check_branch
    %19 = sbr.rel (0) target = $region13
  $region12: #{fnn_relu_forward.1} parent=0 // pred_region
    _
  $region13: #{fnn_relu_forward.1} parent=0 // pred_fallthru
    _
  // Predicated region
  $region14: #{fnn_relu_forward.1} parent=0 // pred_check
    _
  $region15: #{fnn_relu_forward.1} parent=0 // pred_check_branch
    %21 = sbr.rel (0) target = $region17
  $region16: #{fnn_relu_forward.1} parent=0 // pred_region
    _
  $region17: #{fnn_relu_forward.1} parent=0 // pred_fallthru
    _
  // Predicated region
  $region18: #{fnn_relu_forward.1} parent=0 // pred_check
    _
  $region19: #{fnn_relu_forward.1} parent=0 // pred_check_branch
    %23 = sbr.rel (0) target = $region21
  $region20: #{fnn_relu_forward.1} parent=0 // pred_region
    _
  $region21: #{fnn_relu_forward.1} parent=0 // pred_fallthru
    _
  // Predicated region
  $region22: #{fnn_relu_forward.1} parent=0 // pred_check
    _
  $region23: #{fnn_relu_forward.1} parent=0 // pred_check_branch
    %25 = sbr.rel (0) target = $region25
  $region24: #{fnn_relu_forward.1} parent=0 // pred_region
    _
  $region25: #{fnn_relu_forward.1} parent=0 // pred_fallthru
    _
  // Predicated region
  $region26: #{fnn_relu_forward.1} parent=0 // pred_check
    _
  $region27: #{fnn_relu_forward.1} parent=0 // pred_check_branch
    %27 = sbr.rel (0) target = $region29
  $region28: #{fnn_relu_forward.1} parent=0 // pred_region
    _
  $region29: #{fnn_relu_forward.1} parent=0 // pred_fallthru
    _
  // Predicated region
  $region30: #{fnn_relu_forward.1} parent=0 // pred_check
    _
  $region31: #{fnn_relu_forward.1} parent=0 // pred_check_branch
    %29 = sbr.rel (0) target = $region33
  $region32: #{fnn_relu_forward.1} parent=0 // pred_region
    _
  $region33: #{fnn_relu_forward.1} parent=0 // pred_fallthru
    _
  // Predicated region
  $region34: #{fnn_relu_forward.1} parent=0 // pred_check
    _
  $region35: #{fnn_relu_forward.1} parent=0 // pred_check_branch
    %31 = sbr.rel (0) target = $region37
  $region36: #{fnn_relu_forward.1} parent=0 // pred_region
    _
  $region37: #{fnn_relu_forward.1} parent=0 // pred_fallthru
    _
  %v32 = vld [vmem:[%s0] sm:$0xff]
  %v33 = vld [vmem:[%s0 + $0x8] sm:$0xff]
  %v34 = vld [vmem:[%s0 + $0x10] sm:$0xff]
  %v35 = vld [vmem:[%s0 + $0x18] sm:$0xff]
  %v36 = vld [vmem:[%s0 + $0x20] sm:$0xff]
  %v37 = vld [vmem:[%s0 + $0x28] sm:$0xff]
  %v38 = vld [vmem:[%s0 + $0x30] sm:$0xff]
  %v39 = vld [vmem:[%s1] sm:$0xff]
  %v40 = vld [vmem:[%s1 + $0x8] sm:$0xff]
  %v41 = vld [vmem:[%s1 + $0x10] sm:$0xff]
  %v42 = vld [vmem:[%s1 + $0x18] sm:$0xff]
  %v43 = vld [vmem:[%s1 + $0x20] sm:$0xff]
  %v44 = vld [vmem:[%s1 + $0x28] sm:$0xff]
  %v45 = vld [vmem:[%s1 + $0x30] sm:$0xff]
  %v46 = vld [vmem:[%s1 + $0x38] sm:$0xff]
  %v47 = vld [vmem:[%s1 + $0x40] sm:$0xff]
  %v48 = vld [vmem:[%s1 + $0x48] sm:$0xff]
  %v49 = vld [vmem:[%s1 + $0x50] sm:$0xff]
  %v50 = vld [vmem:[%s1 + $0x58] sm:$0xff]
  %v51 = vld [vmem:[%s1 + $0x60] sm:$0xff]
  %v52 = vld [vmem:[%s1 + $0x68] sm:$0xff]
  %v53 = vld [vmem:[%s1 + $0x70] sm:$0xff]
  %v54 = vld [vmem:[%s1 + $0x78] sm:$0xff]
  %v55 = vld [vmem:[%s1 + $0x80] sm:$0xff]
  %v56 = vld [vmem:[%s1 + $0x88] sm:$0xff]
  %v57 = vld [vmem:[%s1 + $0x90] sm:$0xff]
  %v58 = vld [vmem:[%s1 + $0x98] sm:$0xff]
  %v59 = vld [vmem:[%s1 + $0xa0] sm:$0xff]
  %v60 = vld [vmem:[%s1 + $0xa8] sm:$0xff]
  %v61 = vld [vmem:[%s1 + $0xb0] sm:$0xff]
  %v62 = vld [vmem:[%s1 + $0xb8] sm:$0xff]
  %v63 = vld [vmem:[%s1 + $0xc0] sm:$0xff]
  %v64 = vld [vmem:[%s1 + $0xc8] sm:$0xff]
  %v65 = vld [vmem:[%s1 + $0xd0] sm:$0xff]
  %v66 = vld [vmem:[%s1 + $0xd8] sm:$0xff]
  %v67 = vld [vmem:[%s1 + $0xe0] sm:$0xff]
  %v68 = vld [vmem:[%s1 + $0xe8] sm:$0xff]
  %v69 = vld [vmem:[%s1 + $0xf0] sm:$0xff]
  %v70 = vld [vmem:[%s1 + $0xf8] sm:$0xff]
  %v71 = vld [vmem:[%s1 + $0x100] sm:$0xff]
  %v72 = vld [vmem:[%s1 + $0x108] sm:$0xff]
  %v73 = vld [vmem:[%s1 + $0x110] sm:$0xff]
  %v74 = vld [vmem:[%s1 + $0x118] sm:$0xff]
  %v75 = vld [vmem:[%s1 + $0x120] sm:$0xff]
  %v76 = vld [vmem:[%s1 + $0x128] sm:$0xff]
  %v77 = vld [vmem:[%s1 + $0x130] sm:$0xff]
  %v78 = vld [vmem:[%s1 + $0x138] sm:$0xff]
  %v79 = vld [vmem:[%s1 + $0x140] sm:$0xff]
  %v80 = vld [vmem:[%s1 + $0x148] sm:$0xff]
  %v81 = vld [vmem:[%s1 + $0x150] sm:$0xff]
  %v82 = vld [vmem:[%s1 + $0x158] sm:$0xff]
  %v83 = vld [vmem:[%s1 + $0x160] sm:$0xff]
  %v84 = vld [vmem:[%s1 + $0x168] sm:$0xff]
  %v85 = vld [vmem:[%s1 + $0x170] sm:$0xff]
  %v86 = vld [vmem:[%s1 + $0x178] sm:$0xff]
  %v87 = vld [vmem:[%s1 + $0x180] sm:$0xff]
  %v88 = vld [vmem:[%s1 + $0x188] sm:$0xff]
  %v89 = vld [vmem:[%s1 + $0x190] sm:$0xff]
  %v90 = vld [vmem:[%s1 + $0x198] sm:$0xff]
  %v91 = vld [vmem:[%s1 + $0x1a0] sm:$0xff]
  %v92 = vld [vmem:[%s1 + $0x1a8] sm:$0xff]
  %v93 = vld [vmem:[%s1 + $0x1b0] sm:$0xff]
  %v94 = vld [vmem:[%s1 + $0x1b8] sm:$0xff]
  %v95 = vld [vmem:[%s1 + $0x1c0] sm:$0xff]
  %v96 = vld [vmem:[%s1 + $0x1c8] sm:$0xff]
  %v97 = vld [vmem:[%s1 + $0x1d0] sm:$0xff]
  %v98 = vld [vmem:[%s1 + $0x1d8] sm:$0xff]
  %v99 = vld [vmem:[%s1 + $0x1e0] sm:$0xff]
  %v100 = vld [vmem:[%s1 + $0x1e8] sm:$0xff]
  %v101 = vld [vmem:[%s1 + $0x1f0] sm:$0xff]
  %v102 = vld [vmem:[%s1 + $0x1f8] sm:$0xff]
  %v103 = vld [vmem:[%s1 + $0x200] sm:$0xff]
  %v104 = vld [vmem:[%s1 + $0x208] sm:$0xff]
  %v105 = vld [vmem:[%s1 + $0x210] sm:$0xff]
  %v106 = vld [vmem:[%s1 + $0x218] sm:$0xff]
  %v107 = vld [vmem:[%s1 + $0x220] sm:$0xff]
  %v108 = vld [vmem:[%s1 + $0x228] sm:$0xff]
  %v109 = vld [vmem:[%s1 + $0x230] sm:$0xff]
  %v110 = vld [vmem:[%s1 + $0x238] sm:$0xff]
  %v111 = vld [vmem:[%s1 + $0x240] sm:$0xff]
  %v112 = vld [vmem:[%s1 + $0x248] sm:$0xff]
  %v113 = vld [vmem:[%s1 + $0x250] sm:$0xff]
  %v114 = vld [vmem:[%s1 + $0x258] sm:$0xff]
  %v115 = vld [vmem:[%s1 + $0x260] sm:$0xff]
  %v116 = vld [vmem:[%s1 + $0x268] sm:$0xff]
  %v117 = vld [vmem:[%s1 + $0x270] sm:$0xff]
  %v118 = vld [vmem:[%s1 + $0x278] sm:$0xff]
  %v119 = vld [vmem:[%s1 + $0x280] sm:$0xff]
  %v120 = vld [vmem:[%s1 + $0x288] sm:$0xff]
  %v121 = vld [vmem:[%s1 + $0x290] sm:$0xff]
  %v122 = vld [vmem:[%s1 + $0x298] sm:$0xff]
  %v123 = vld [vmem:[%s1 + $0x2a0] sm:$0xff]
  %v124 = vld [vmem:[%s1 + $0x2a8] sm:$0xff]
  %v125 = vld [vmem:[%s1 + $0x2b0] sm:$0xff]
  %v126 = vld [vmem:[%s1 + $0x2b8] sm:$0xff]
  %v127 = vld [vmem:[%s1 + $0x2c0] sm:$0xff]
  %v128 = vld [vmem:[%s1 + $0x2c8] sm:$0xff]
  %v129 = vld [vmem:[%s1 + $0x2d0] sm:$0xff]
  %v130 = vld [vmem:[%s1 + $0x2d8] sm:$0xff]
  %v131 = vld [vmem:[%s1 + $0x2e0] sm:$0xff]
  %v132 = vld [vmem:[%s1 + $0x2e8] sm:$0xff]
  %v133 = vld [vmem:[%s1 + $0x2f0] sm:$0xff]
  %v134 = vld [vmem:[%s1 + $0x2f8] sm:$0xff]
  %v135 = vld [vmem:[%s1 + $0x300] sm:$0xff]
  %v136 = vld [vmem:[%s1 + $0x308] sm:$0xff]
  %v137 = vld [vmem:[%s2] sm:$0x1]
  %v139 = vlaneseq
  %v140 = vshrl.u32 %v139, 7
  %v141 = vsub.s32 0, %v140
  %v142 = vrot.slane %v137, %v141
  %vm144 = vcmask 130048
  %v146 = vsel %vm144, %v38, 0
  %148 = vmatprep.subr.mxu0 0.0
  %149 = vmatpush1.msra.mxu0 %v54
  %150 = vmatprep.subr.mxu0 0.0
  %151 = vmatpush1.msra.mxu0 %v53
  %152 = vmatprep.subr.mxu0 0.0
  %153 = vmatpush1.msra.mxu0 %v52
  %154 = vmatprep.subr.mxu0 0.0
  %155 = vmatpush1.msra.mxu0 %v51
  %156 = vmatprep.subr.mxu0 0.0
  %157 = vmatpush1.msra.mxu0 %v50
  %158 = vmatprep.subr.mxu0 0.0
  %159 = vmatpush1.msra.mxu0 %v49
  %160 = vmatprep.subr.mxu0 0.0
  %161 = vmatpush1.msra.mxu0 %v48
  %162 = vmatprep.subr.mxu0 0.0
  %163 = vmatpush1.msra.mxu0 %v47
  %164 = vmatprep.subr.mxu0 0.0
  %165 = vmatpush1.msra.mxu0 %v46
  %166 = vmatprep.subr.mxu0 0.0
  %167 = vmatpush1.msra.mxu0 %v45
  %168 = vmatprep.subr.mxu0 0.0
  %169 = vmatpush1.msra.mxu0 %v44
  %170 = vmatprep.subr.mxu0 0.0
  %171 = vmatpush1.msra.mxu0 %v43
  %172 = vmatprep.subr.mxu0 0.0
  %173 = vmatpush1.msra.mxu0 %v42
  %174 = vmatprep.subr.mxu0 0.0
  %175 = vmatpush1.msra.mxu0 %v41
  %176 = vmatprep.subr.mxu0 0.0
  %177 = vmatpush1.msra.mxu0 %v40
  %178 = vmatprep.subr.mxu0 0.0
  %179 = vmatpush1.msra.mxu0 %v39
  %180 = vmatprep.subr.mxu0 0.0
  %181 = vmatpush2.msra.mxu0 %v70
  %182 = vmatprep.subr.mxu0 0.0
  %183 = vmatpush2.msra.mxu0 %v69
  %184 = vmatprep.subr.mxu0 0.0
  %185 = vmatpush2.msra.mxu0 %v68
  %186 = vmatprep.subr.mxu0 0.0
  %187 = vmatpush2.msra.mxu0 %v67
  %188 = vmatprep.subr.mxu0 0.0
  %189 = vmatpush2.msra.mxu0 %v66
  %190 = vmatprep.subr.mxu0 0.0
  %191 = vmatpush2.msra.mxu0 %v65
  %192 = vmatprep.subr.mxu0 0.0
  %193 = vmatpush2.msra.mxu0 %v64
  %194 = vmatprep.subr.mxu0 0.0
  %195 = vmatpush2.msra.mxu0 %v63
  %196 = vmatprep.subr.mxu0 0.0
  %197 = vmatpush2.msra.mxu0 %v62
  %198 = vmatprep.subr.mxu0 0.0
  %199 = vmatpush2.msra.mxu0 %v61
  %200 = vmatprep.subr.mxu0 0.0
  %201 = vmatpush2.msra.mxu0 %v60
  %202 = vmatprep.subr.mxu0 0.0
  %203 = vmatpush2.msra.mxu0 %v59
  %204 = vmatprep.subr.mxu0 0.0
  %205 = vmatpush2.msra.mxu0 %v58
  %206 = vmatprep.subr.mxu0 0.0
  %207 = vmatpush2.msra.mxu0 %v57
  %208 = vmatprep.subr.mxu0 0.0
  %209 = vmatpush2.msra.mxu0 %v56
  %210 = vmatprep.subr.mxu0 0.0
  %211 = vmatpush2.msra.mxu0 %v55
  %212 = vmatprep.mubr.f32.mxu0 %v33
  %213 = vmatmul.mubr.f32.gmra.mxu0 %v32
  %v214 = vpop.f32.mrf.mxu0
  %v215 = vadd.f32 %v142, %v214
  %v216 = vpop.f32.mrf.mxu0
  %217 = vdwg.mxu0
  %218 = vmatprep.subr.mxu0 0.0
  %219 = vmatpush1.msra.mxu0 %v86
  %220 = vmatprep.subr.mxu0 0.0
  %221 = vmatpush1.msra.mxu0 %v85
  %222 = vmatprep.subr.mxu0 0.0
  %223 = vmatpush1.msra.mxu0 %v84
  %224 = vmatprep.subr.mxu0 0.0
  %225 = vmatpush1.msra.mxu0 %v83
  %226 = vmatprep.subr.mxu0 0.0
  %227 = vmatpush1.msra.mxu0 %v82
  %228 = vmatprep.subr.mxu0 0.0
  %229 = vmatpush1.msra.mxu0 %v81
  %230 = vmatprep.subr.mxu0 0.0
  %231 = vmatpush1.msra.mxu0 %v80
  %232 = vmatprep.subr.mxu0 0.0
  %233 = vmatpush1.msra.mxu0 %v79
  %234 = vmatprep.subr.mxu0 0.0
  %235 = vmatpush1.msra.mxu0 %v78
  %236 = vmatprep.subr.mxu0 0.0
  %237 = vmatpush1.msra.mxu0 %v77
  %238 = vmatprep.subr.mxu0 0.0
  %239 = vmatpush1.msra.mxu0 %v76
  %240 = vmatprep.subr.mxu0 0.0
  %241 = vmatpush1.msra.mxu0 %v75
  %242 = vmatprep.subr.mxu0 0.0
  %243 = vmatpush1.msra.mxu0 %v74
  %244 = vmatprep.subr.mxu0 0.0
  %245 = vmatpush1.msra.mxu0 %v73
  %246 = vmatprep.subr.mxu0 0.0
  %247 = vmatpush1.msra.mxu0 %v72
  %248 = vmatprep.subr.mxu0 0.0
  %249 = vmatpush1.msra.mxu0 %v71
  %250 = vmatprep.subr.mxu0 0.0
  %251 = vmatpush2.msra.mxu0 %v102
  %252 = vmatprep.subr.mxu0 0.0
  %253 = vmatpush2.msra.mxu0 %v101
  %254 = vmatprep.subr.mxu0 0.0
  %255 = vmatpush2.msra.mxu0 %v100
  %256 = vmatprep.subr.mxu0 0.0
  %257 = vmatpush2.msra.mxu0 %v99
  %258 = vmatprep.subr.mxu0 0.0
  %259 = vmatpush2.msra.mxu0 %v98
  %260 = vmatprep.subr.mxu0 0.0
  %261 = vmatpush2.msra.mxu0 %v97
  %262 = vmatprep.subr.mxu0 0.0
  %263 = vmatpush2.msra.mxu0 %v96
  %264 = vmatprep.subr.mxu0 0.0
  %265 = vmatpush2.msra.mxu0 %v95
  %266 = vmatprep.subr.mxu0 0.0
  %267 = vmatpush2.msra.mxu0 %v94
  %268 = vmatprep.subr.mxu0 0.0
  %269 = vmatpush2.msra.mxu0 %v93
  %270 = vmatprep.subr.mxu0 0.0
  %271 = vmatpush2.msra.mxu0 %v92
  %272 = vmatprep.subr.mxu0 0.0
  %273 = vmatpush2.msra.mxu0 %v91
  %274 = vmatprep.subr.mxu0 0.0
  %275 = vmatpush2.msra.mxu0 %v90
  %276 = vmatprep.subr.mxu0 0.0
  %277 = vmatpush2.msra.mxu0 %v89
  %278 = vmatprep.subr.mxu0 0.0
  %279 = vmatpush2.msra.mxu0 %v88
  %280 = vmatprep.subr.mxu0 0.0
  %281 = vmatpush2.msra.mxu0 %v87
  %282 = vmatprep.mubr.f32.mxu0 %v35
  %283 = vmatmul.mubr.f32.gmra.mxu0 %v34
  %v284 = vpop.f32.mrf.mxu0
  %v285 = vadd.f32 %v215, %v284
  %v286 = vpop.f32.mrf.mxu0
  %287 = vdwg.mxu0
  %288 = vmatprep.subr.mxu0 0.0
  %289 = vmatpush1.msra.mxu0 %v118
  %290 = vmatprep.subr.mxu0 0.0
  %291 = vmatpush1.msra.mxu0 %v117
  %292 = vmatprep.subr.mxu0 0.0
  %293 = vmatpush1.msra.mxu0 %v116
  %294 = vmatprep.subr.mxu0 0.0
  %295 = vmatpush1.msra.mxu0 %v115
  %296 = vmatprep.subr.mxu0 0.0
  %297 = vmatpush1.msra.mxu0 %v114
  %298 = vmatprep.subr.mxu0 0.0
  %299 = vmatpush1.msra.mxu0 %v113
  %300 = vmatprep.subr.mxu0 0.0
  %301 = vmatpush1.msra.mxu0 %v112
  %302 = vmatprep.subr.mxu0 0.0
  %303 = vmatpush1.msra.mxu0 %v111
  %304 = vmatprep.subr.mxu0 0.0
  %305 = vmatpush1.msra.mxu0 %v110
  %306 = vmatprep.subr.mxu0 0.0
  %307 = vmatpush1.msra.mxu0 %v109
  %308 = vmatprep.subr.mxu0 0.0
  %309 = vmatpush1.msra.mxu0 %v108
  %310 = vmatprep.subr.mxu0 0.0
  %311 = vmatpush1.msra.mxu0 %v107
  %312 = vmatprep.subr.mxu0 0.0
  %313 = vmatpush1.msra.mxu0 %v106
  %314 = vmatprep.subr.mxu0 0.0
  %315 = vmatpush1.msra.mxu0 %v105
  %316 = vmatprep.subr.mxu0 0.0
  %317 = vmatpush1.msra.mxu0 %v104
  %318 = vmatprep.subr.mxu0 0.0
  %319 = vmatpush1.msra.mxu0 %v103
  %320 = vmatprep.subr.mxu0 0.0
  %321 = vmatpush2.msra.mxu0 %v134
  %322 = vmatprep.subr.mxu0 0.0
  %323 = vmatpush2.msra.mxu0 %v133
  %324 = vmatprep.subr.mxu0 0.0
  %325 = vmatpush2.msra.mxu0 %v132
  %326 = vmatprep.subr.mxu0 0.0
  %327 = vmatpush2.msra.mxu0 %v131
  %328 = vmatprep.subr.mxu0 0.0
  %329 = vmatpush2.msra.mxu0 %v130
  %330 = vmatprep.subr.mxu0 0.0
  %331 = vmatpush2.msra.mxu0 %v129
  %332 = vmatprep.subr.mxu0 0.0
  %333 = vmatpush2.msra.mxu0 %v128
  %334 = vmatprep.subr.mxu0 0.0
  %335 = vmatpush2.msra.mxu0 %v127
  %336 = vmatprep.subr.mxu0 0.0
  %337 = vmatpush2.msra.mxu0 %v126
  %338 = vmatprep.subr.mxu0 0.0
  %339 = vmatpush2.msra.mxu0 %v125
  %340 = vmatprep.subr.mxu0 0.0
  %341 = vmatpush2.msra.mxu0 %v124
  %342 = vmatprep.subr.mxu0 0.0
  %343 = vmatpush2.msra.mxu0 %v123
  %344 = vmatprep.subr.mxu0 0.0
  %345 = vmatpush2.msra.mxu0 %v122
  %346 = vmatprep.subr.mxu0 0.0
  %347 = vmatpush2.msra.mxu0 %v121
  %348 = vmatprep.subr.mxu0 0.0
  %349 = vmatpush2.msra.mxu0 %v120
  %350 = vmatprep.subr.mxu0 0.0
  %351 = vmatpush2.msra.mxu0 %v119
  %352 = vmatprep.mubr.f32.mxu0 %v37
  %353 = vmatmul.mubr.f32.gmra.mxu0 %v36
  %v354 = vpop.f32.mrf.mxu0
  %v355 = vadd.f32 %v285, %v354
  %v356 = vpop.f32.mrf.mxu0
  %357 = vdwg.mxu0
  %358 = vmatprep.subr.mxu0 0.0
  %359 = vmatpush1.msra.mxu0 0.0
  %360 = vmatprep.subr.mxu0 0.0
  %361 = vmatpush1.msra.mxu0 0.0
  %362 = vmatprep.subr.mxu0 0.0
  %363 = vmatpush1.msra.mxu0 0.0
  %364 = vmatprep.subr.mxu0 0.0
  %365 = vmatpush1.msra.mxu0 0.0
  %366 = vmatprep.subr.mxu0 0.0
  %367 = vmatpush1.msra.mxu0 0.0
  %368 = vmatprep.subr.mxu0 0.0
  %369 = vmatpush1.msra.mxu0 0.0
  %370 = vmatprep.subr.mxu0 0.0
  %371 = vmatpush1.msra.mxu0 0.0
  %372 = vmatprep.subr.mxu0 0.0
  %373 = vmatpush1.msra.mxu0 0.0
  %374 = vmatprep.subr.mxu0 0.0
  %375 = vmatpush1.msra.mxu0 0.0
  %376 = vmatprep.subr.mxu0 0.0
  %377 = vmatpush1.msra.mxu0 0.0
  %378 = vmatprep.subr.mxu0 0.0
  %379 = vmatpush1.msra.mxu0 0.0
  %380 = vmatprep.subr.mxu0 0.0
  %381 = vmatpush1.msra.mxu0 0.0
  %382 = vmatprep.subr.mxu0 0.0
  %383 = vmatpush1.msra.mxu0 0.0
  %384 = vmatprep.subr.mxu0 0.0
  %385 = vmatpush1.msra.mxu0 0.0
  %386 = vmatprep.subr.mxu0 0.0
  %387 = vmatpush1.msra.mxu0 %v136
  %388 = vmatprep.subr.mxu0 0.0
  %389 = vmatpush1.msra.mxu0 %v135
  %390 = vmatprep.subr.mxu0 0.0
  %391 = vmatpush2.msra.mxu0 0.0
  %392 = vmatprep.subr.mxu0 0.0
  %393 = vmatpush2.msra.mxu0 0.0
  %394 = vmatprep.subr.mxu0 0.0
  %395 = vmatpush2.msra.mxu0 0.0
  %396 = vmatprep.subr.mxu0 0.0
  %397 = vmatpush2.msra.mxu0 0.0
  %398 = vmatprep.subr.mxu0 0.0
  %399 = vmatpush2.msra.mxu0 0.0
  %400 = vmatprep.subr.mxu0 0.0
  %401 = vmatpush2.msra.mxu0 0.0
  %402 = vmatprep.subr.mxu0 0.0
  %403 = vmatpush2.msra.mxu0 0.0
  %404 = vmatprep.subr.mxu0 0.0
  %405 = vmatpush2.msra.mxu0 0.0
  %406 = vmatprep.subr.mxu0 0.0
  %407 = vmatpush2.msra.mxu0 0.0
  %408 = vmatprep.subr.mxu0 0.0
  %409 = vmatpush2.msra.mxu0 0.0
  %410 = vmatprep.subr.mxu0 0.0
  %411 = vmatpush2.msra.mxu0 0.0
  %412 = vmatprep.subr.mxu0 0.0
  %413 = vmatpush2.msra.mxu0 0.0
  %414 = vmatprep.subr.mxu0 0.0
  %415 = vmatpush2.msra.mxu0 0.0
  %416 = vmatprep.subr.mxu0 0.0
  %417 = vmatpush2.msra.mxu0 0.0
  %418 = vmatprep.subr.mxu0 0.0
  %419 = vmatpush2.msra.mxu0 0.0
  %420 = vmatprep.subr.mxu0 0.0
  %421 = vmatpush2.msra.mxu0 0.0
  %422 = vmatprep.mubr.f32.mxu0 0.0
  %423 = vmatmul.mubr.f32.gmra.mxu0 %v146
  %v424 = vpop.f32.mrf.mxu0
  %v425 = vadd.f32 %v355, %v424
  %v426 = vpop.f32.mrf.mxu0
  %427 = vdwg.mxu0
  %v428 = vmax.f32 %v425, 0.0
  %v429 = vld [vmem:[%s3] sm:$0xff]
  %v430 = vld [vmem:[%s3 + $0x8] sm:$0x1]
  %v431 = vld [vmem:[%s4] sm:$0x1]
  %v433 = vlaneseq
  %v434 = vshrl.u32 %v433, 7
  %v435 = vsub.s32 0, %v434
  %v436 = vrot.slane %v431, %v435
  %vm438 = vcmask 72704
  %v440 = vsel %vm438, %v428, 0
  %vm442 = vcmask 1040384
  %v444 = vsel %vm442, %v430, 0
  %446 = vmatprep.subr.mxu0 0.0
  %447 = vmatpush1.msra.mxu0 0.0
  %448 = vmatprep.subr.mxu0 0.0
  %449 = vmatpush1.msra.mxu0 0.0
  %450 = vmatprep.subr.mxu0 0.0
  %451 = vmatpush1.msra.mxu0 0.0
  %452 = vmatprep.subr.mxu0 0.0
  %453 = vmatpush1.msra.mxu0 0.0
  %454 = vmatprep.subr.mxu0 0.0
  %455 = vmatpush1.msra.mxu0 0.0
  %456 = vmatprep.subr.mxu0 0.0
  %457 = vmatpush1.msra.mxu0 0.0
  %458 = vmatprep.subr.mxu0 0.0
  %459 = vmatpush1.msra.mxu0 0.0
  %460 = vmatprep.subr.mxu0 0.0
  %461 = vmatpush1.msra.mxu0 0.0
  %462 = vmatprep.subr.mxu0 0.0
  %463 = vmatpush1.msra.mxu0 0.0
  %464 = vmatprep.subr.mxu0 0.0
  %465 = vmatpush1.msra.mxu0 0.0
  %466 = vmatprep.subr.mxu0 0.0
  %467 = vmatpush1.msra.mxu0 0.0
  %468 = vmatprep.subr.mxu0 0.0
  %469 = vmatpush1.msra.mxu0 0.0
  %470 = vmatprep.subr.mxu0 0.0
  %471 = vmatpush1.msra.mxu0 0.0
  %472 = vmatprep.subr.mxu0 0.0
  %473 = vmatpush1.msra.mxu0 0.0
  %474 = vmatprep.subr.mxu0 0.0
  %475 = vmatpush1.msra.mxu0 %v444
  %476 = vmatprep.subr.mxu0 0.0
  %477 = vmatpush1.msra.mxu0 %v429
  %478 = vmatprep.subr.mxu0 0.0
  %479 = vmatpush2.msra.mxu0 0.0
  %480 = vmatprep.subr.mxu0 0.0
  %481 = vmatpush2.msra.mxu0 0.0
  %482 = vmatprep.subr.mxu0 0.0
  %483 = vmatpush2.msra.mxu0 0.0
  %484 = vmatprep.subr.mxu0 0.0
  %485 = vmatpush2.msra.mxu0 0.0
  %486 = vmatprep.subr.mxu0 0.0
  %487 = vmatpush2.msra.mxu0 0.0
  %488 = vmatprep.subr.mxu0 0.0
  %489 = vmatpush2.msra.mxu0 0.0
  %490 = vmatprep.subr.mxu0 0.0
  %491 = vmatpush2.msra.mxu0 0.0
  %492 = vmatprep.subr.mxu0 0.0
  %493 = vmatpush2.msra.mxu0 0.0
  %494 = vmatprep.subr.mxu0 0.0
  %495 = vmatpush2.msra.mxu0 0.0
  %496 = vmatprep.subr.mxu0 0.0
  %497 = vmatpush2.msra.mxu0 0.0
  %498 = vmatprep.subr.mxu0 0.0
  %499 = vmatpush2.msra.mxu0 0.0
  %500 = vmatprep.subr.mxu0 0.0
  %501 = vmatpush2.msra.mxu0 0.0
  %502 = vmatprep.subr.mxu0 0.0
  %503 = vmatpush2.msra.mxu0 0.0
  %504 = vmatprep.subr.mxu0 0.0
  %505 = vmatpush2.msra.mxu0 0.0
  %506 = vmatprep.subr.mxu0 0.0
  %507 = vmatpush2.msra.mxu0 0.0
  %508 = vmatprep.subr.mxu0 0.0
  %509 = vmatpush2.msra.mxu0 0.0
  %510 = vmatprep.mubr.f32.mxu0 0.0
  %511 = vmatmul.mubr.f32.gmra.mxu0 %v440
  %v512 = vpop.f32.mrf.mxu0
  %v513 = vadd.f32 %v436, %v512
  %v514 = vpop.f32.mrf.mxu0
  %515 = vdwg.mxu0
  %v516 = vmax.f32 %v513, 0.0
  %v517 = vld [vmem:[%s5] sm:$0x7f]
  %v518 = vld [vmem:[%s6] sm:$0x1]
  %v520 = vlaneseq
  %v521 = vshrl.u32 %v520, 7
  %v522 = vsub.s32 0, %v521
  %v523 = vrot.slane %v518, %v522
  %vm525 = vcmask 56320
  %v527 = vsel %vm525, %v516, 0
  %vm529 = vcmask 1046528
  %v531 = vsel %vm529, %v517, 0
  %533 = vmatprep.subr.mxu0 0.0
  %534 = vmatpush1.msra.mxu0 0.0
  %535 = vmatprep.subr.mxu0 0.0
  %536 = vmatpush1.msra.mxu0 0.0
  %537 = vmatprep.subr.mxu0 0.0
  %538 = vmatpush1.msra.mxu0 0.0
  %539 = vmatprep.subr.mxu0 0.0
  %540 = vmatpush1.msra.mxu0 0.0
  %541 = vmatprep.subr.mxu0 0.0
  %542 = vmatpush1.msra.mxu0 0.0
  %543 = vmatprep.subr.mxu0 0.0
  %544 = vmatpush1.msra.mxu0 0.0
  %545 = vmatprep.subr.mxu0 0.0
  %546 = vmatpush1.msra.mxu0 0.0
  %547 = vmatprep.subr.mxu0 0.0
  %548 = vmatpush1.msra.mxu0 0.0
  %549 = vmatprep.subr.mxu0 0.0
  %550 = vmatpush1.msra.mxu0 0.0
  %551 = vmatprep.subr.mxu0 0.0
  %552 = vmatpush1.msra.mxu0 0.0
  %553 = vmatprep.subr.mxu0 0.0
  %554 = vmatpush1.msra.mxu0 0.0
  %555 = vmatprep.subr.mxu0 0.0
  %556 = vmatpush1.msra.mxu0 0.0
  %557 = vmatprep.subr.mxu0 0.0
  %558 = vmatpush1.msra.mxu0 0.0
  %559 = vmatprep.subr.mxu0 0.0
  %560 = vmatpush1.msra.mxu0 0.0
  %561 = vmatprep.subr.mxu0 0.0
  %562 = vmatpush1.msra.mxu0 0.0
  %563 = vmatprep.subr.mxu0 0.0
  %564 = vmatpush1.msra.mxu0 %v531
  %565 = vmatprep.subr.mxu0 0.0
  %566 = vmatpush2.msra.mxu0 0.0
  %567 = vmatprep.subr.mxu0 0.0
  %568 = vmatpush2.msra.mxu0 0.0
  %569 = vmatprep.subr.mxu0 0.0
  %570 = vmatpush2.msra.mxu0 0.0
  %571 = vmatprep.subr.mxu0 0.0
  %572 = vmatpush2.msra.mxu0 0.0
  %573 = vmatprep.subr.mxu0 0.0
  %574 = vmatpush2.msra.mxu0 0.0
  %575 = vmatprep.subr.mxu0 0.0
  %576 = vmatpush2.msra.mxu0 0.0
  %577 = vmatprep.subr.mxu0 0.0
  %578 = vmatpush2.msra.mxu0 0.0
  %579 = vmatprep.subr.mxu0 0.0
  %580 = vmatpush2.msra.mxu0 0.0
  %581 = vmatprep.subr.mxu0 0.0
  %582 = vmatpush2.msra.mxu0 0.0
  %583 = vmatprep.subr.mxu0 0.0
  %584 = vmatpush2.msra.mxu0 0.0
  %585 = vmatprep.subr.mxu0 0.0
  %586 = vmatpush2.msra.mxu0 0.0
  %587 = vmatprep.subr.mxu0 0.0
  %588 = vmatpush2.msra.mxu0 0.0
  %589 = vmatprep.subr.mxu0 0.0
  %590 = vmatpush2.msra.mxu0 0.0
  %591 = vmatprep.subr.mxu0 0.0
  %592 = vmatpush2.msra.mxu0 0.0
  %593 = vmatprep.subr.mxu0 0.0
  %594 = vmatpush2.msra.mxu0 0.0
  %595 = vmatprep.subr.mxu0 0.0
  %596 = vmatpush2.msra.mxu0 0.0
  %597 = vmatprep.mubr.f32.mxu0 0.0
  %598 = vmatmul.mubr.f32.gmra.mxu0 %v527
  %v599 = vpop.f32.mrf.mxu0
  %v600 = vadd.f32 %v523, %v599
  %v601 = vpop.f32.mrf.mxu0
  %602 = vdwg.mxu0
  %v603 = vmax.f32 %v600, 0.0
  %v604 = vld [vmem:[%s7] sm:$0x1f]
  %v605 = vld [vmem:[%s8] sm:$0x1]
  %v607 = vlaneseq
  %v608 = vshrl.u32 %v607, 7
  %v609 = vsub.s32 0, %v608
  %v610 = vrot.slane %v605, %v609
  %vm612 = vcmask 39936
  %v614 = vsel %vm612, %v603, 0
  %vm616 = vcmask 1044480
  %v618 = vsel %vm616, %v604, 0
  %620 = vmatprep.subr.mxu0 0.0
  %621 = vmatpush1.msra.mxu0 0.0
  %622 = vmatprep.subr.mxu0 0.0
  %623 = vmatpush1.msra.mxu0 0.0
  %624 = vmatprep.subr.mxu0 0.0
  %625 = vmatpush1.msra.mxu0 0.0
  %626 = vmatprep.subr.mxu0 0.0
  %627 = vmatpush1.msra.mxu0 0.0
  %628 = vmatprep.subr.mxu0 0.0
  %629 = vmatpush1.msra.mxu0 0.0
  %630 = vmatprep.subr.mxu0 0.0
  %631 = vmatpush1.msra.mxu0 0.0
  %632 = vmatprep.subr.mxu0 0.0
  %633 = vmatpush1.msra.mxu0 0.0
  %634 = vmatprep.subr.mxu0 0.0
  %635 = vmatpush1.msra.mxu0 0.0
  %636 = vmatprep.subr.mxu0 0.0
  %637 = vmatpush1.msra.mxu0 0.0
  %638 = vmatprep.subr.mxu0 0.0
  %639 = vmatpush1.msra.mxu0 0.0
  %640 = vmatprep.subr.mxu0 0.0
  %641 = vmatpush1.msra.mxu0 0.0
  %642 = vmatprep.subr.mxu0 0.0
  %643 = vmatpush1.msra.mxu0 0.0
  %644 = vmatprep.subr.mxu0 0.0
  %645 = vmatpush1.msra.mxu0 0.0
  %646 = vmatprep.subr.mxu0 0.0
  %647 = vmatpush1.msra.mxu0 0.0
  %648 = vmatprep.subr.mxu0 0.0
  %649 = vmatpush1.msra.mxu0 0.0
  %650 = vmatprep.subr.mxu0 0.0
  %651 = vmatpush1.msra.mxu0 %v618
  %652 = vmatprep.subr.mxu0 0.0
  %653 = vmatpush2.msra.mxu0 0.0
  %654 = vmatprep.subr.mxu0 0.0
  %655 = vmatpush2.msra.mxu0 0.0
  %656 = vmatprep.subr.mxu0 0.0
  %657 = vmatpush2.msra.mxu0 0.0
  %658 = vmatprep.subr.mxu0 0.0
  %659 = vmatpush2.msra.mxu0 0.0
  %660 = vmatprep.subr.mxu0 0.0
  %661 = vmatpush2.msra.mxu0 0.0
  %662 = vmatprep.subr.mxu0 0.0
  %663 = vmatpush2.msra.mxu0 0.0
  %664 = vmatprep.subr.mxu0 0.0
  %665 = vmatpush2.msra.mxu0 0.0
  %666 = vmatprep.subr.mxu0 0.0
  %667 = vmatpush2.msra.mxu0 0.0
  %668 = vmatprep.subr.mxu0 0.0
  %669 = vmatpush2.msra.mxu0 0.0
  %670 = vmatprep.subr.mxu0 0.0
  %671 = vmatpush2.msra.mxu0 0.0
  %672 = vmatprep.subr.mxu0 0.0
  %673 = vmatpush2.msra.mxu0 0.0
  %674 = vmatprep.subr.mxu0 0.0
  %675 = vmatpush2.msra.mxu0 0.0
  %676 = vmatprep.subr.mxu0 0.0
  %677 = vmatpush2.msra.mxu0 0.0
  %678 = vmatprep.subr.mxu0 0.0
  %679 = vmatpush2.msra.mxu0 0.0
  %680 = vmatprep.subr.mxu0 0.0
  %681 = vmatpush2.msra.mxu0 0.0
  %682 = vmatprep.subr.mxu0 0.0
  %683 = vmatpush2.msra.mxu0 0.0
  %684 = vmatprep.mubr.f32.mxu0 0.0
  %685 = vmatmul.mubr.f32.gmra.mxu0 %v614
  %v686 = vpop.f32.mrf.mxu0
  %v687 = vadd.f32 %v610, %v686
  %v688 = vpop.f32.mrf.mxu0
  %689 = vdwg.mxu0
  %vm690 = vcmask 80896
  %691 = vst.msk [vmem:[%s9] sm:$0xff] %vm690, %v687
  // Predicated region
  $region38: #{fnn_relu_forward.1} parent=0 // pred_check
    _
  $region39: #{fnn_relu_forward.1} parent=0 // pred_check_branch
    %693 = sbr.rel (0) target = $region41
  $region40: #{fnn_relu_forward.1} parent=0 // pred_region
    _
  $region41: #{fnn_relu_forward.1} parent=0 // pred_fallthru
    _
  // Predicated region
  $region42: #{fnn_relu_forward.1} parent=0 // pred_check
    _
  $region43: #{fnn_relu_forward.1} parent=0 // pred_check_branch
    %695 = sbr.rel (0) target = $region45
  $region44: #{fnn_relu_forward.1} parent=0 // pred_region
    _
  $region45: #{fnn_relu_forward.1} parent=0 // pred_fallthru
    _

</llo_original>
